<compile_context>
chip_gen: v6e
topology: v6e:2x2x1
jax: 0.10.0
libtpu: 0.0.40
codegen_flags: <defaults>
</compile_context>

<pallas_src>
import jax
import jax.numpy as jnp
from jax.experimental import pallas as pl
from jax.experimental.pallas import tpu as pltpu

STATE_SIZE = 3
ACTION_SIZE = 3
HIDDEN = 32

LANE = 128       # TPU lane width: batch tiles are multiples of this
SUBL = 8         # feature dims padded to 8 sublanes -> full (8,128) tiles on load/store
MAX_TB = 8192    # max batch-tile (lane) width per grid step (amortizes per-step overhead)
MIN_STEPS = 2    # prefer >= 2 grid steps so the "parallel" axis shards across v7x cores


def _round_up(n, m):
    return ((n + m - 1) // m) * m


def _pick_tile(batch):
    """Pick (tb, Bp, steps): lane-aligned tile, padded batch, grid steps.

    tb is derived from the batch (not the other way round) so padding stays small,
    capped at MAX_TB, and split into >= MIN_STEPS steps when possible (v7x megacore).
    """
    bp_lane = _round_up(max(int(batch), 1), LANE)
    n_lane_tiles = bp_lane // LANE
    steps = min(
        n_lane_tiles,
        max(pl.cdiv(bp_lane, MAX_TB), MIN_STEPS if n_lane_tiles >= MIN_STEPS else 1),
    )
    tb = _round_up(pl.cdiv(bp_lane, steps), LANE)
    return tb, tb * steps, steps


def dqn_kernel(x_ref, w1_ref, w2_ref, w3_ref, b_ref, out_ref):
    """Fused feature-major MLP: out = W3 @ relu(W2 @ relu(W1 @ x + b1) + b2) + b3.

    x_ref  : (SUBL, TB) f32   batch on lanes; rows >= STATE_SIZE are zero padding
    w1_ref : (HIDDEN, STATE_SIZE) f32   (layer 1 runs on the VPU)
    w2_ref : (HIDDEN, HIDDEN)     bf16  (MXU, f32 accumulate)
    w3_ref : (SUBL, HIDDEN)       bf16  rows >= ACTION_SIZE are zero (full-tile store)
    b_ref  : (HIDDEN, 3) f32 packed bias columns [b1 | b2 | b3 (zero-padded)]
    out_ref: (SUBL, TB) f32   lane-dense, full-sublane output tile
    """
    x = x_ref[...]                        # (SUBL, TB) f32
    w1 = w1_ref[...]                      # (HIDDEN, STATE_SIZE) f32
    b1 = b_ref[:, 0:1]                    # (HIDDEN, 1)
    b2 = b_ref[:, 1:2]                    # (HIDDEN, 1)
    b3 = b_ref[0:SUBL, 2:3]               # (SUBL, 1); rows >= ACTION_SIZE are zero

    # Layer 1 (K=3): three broadcasted mul/adds on the VPU instead of an MXU push.
    h1 = b1 + (w1[:, 0:1] * x[0:1, :]
               + w1[:, 1:2] * x[1:2, :]
               + w1[:, 2:3] * x[2:3, :])                      # (HIDDEN, TB) f32
    h1 = jnp.maximum(h1, 0.0)

    # Layer 2: Linear(32, 32) + ReLU on the MXU, bf16 in / f32 accumulate.
    h2 = jnp.dot(w2_ref[...], h1.astype(jnp.bfloat16),
                 preferred_element_type=jnp.float32)          # (HIDDEN, TB)
    h2 = jnp.maximum(h2 + b2, 0.0)

    # Layer 3: Linear(32, 3); W3 rows zero-padded to SUBL so the store is a full tile.
    q = jnp.dot(w3_ref[...], h2.astype(jnp.bfloat16),
                preferred_element_type=jnp.float32)           # (SUBL, TB)
    out_ref[...] = (q + b3).astype(out_ref.dtype)


def _dqn_pallas(xt, params, tb):
    """xt: (SUBL, Bp) f32 feature-major, Bp % tb == 0. Returns (SUBL, Bp) f32."""
    _, Bp = xt.shape
    w1 = params["w1"]
    w2 = params["w2_bf16"]
    w3p = params["w3p_bf16"]
    bpack = params["b_packed"]

    resident = lambda i: (0, 0)  # weights / packed biases stay VMEM-resident

    flops = 2 * Bp * (STATE_SIZE * HIDDEN + HIDDEN * HIDDEN + HIDDEN * ACTION_SIZE)
    bytes_accessed = (2 * SUBL * Bp * 4            # x in + out
                      + w1.size * 4 + w2.size * 2 + w3p.size * 2 + bpack.size * 4)

    return pl.pallas_call(
        dqn_kernel,
        out_shape=jax.ShapeDtypeStruct((SUBL, Bp), jnp.float32),
        grid=(Bp // tb,),
        in_specs=[
            pl.BlockSpec((SUBL, tb), lambda i: (0, i)),   # x tile, lane-dense, 8 sublanes
            pl.BlockSpec(w1.shape, resident),             # (32, 3)  f32
            pl.BlockSpec(w2.shape, resident),             # (32, 32) bf16
            pl.BlockSpec(w3p.shape, resident),            # (8, 32)  bf16
            pl.BlockSpec(bpack.shape, resident),          # (32, 3)  f32
        ],
        out_specs=pl.BlockSpec((SUBL, tb), lambda i: (0, i)),
        compiler_params=pltpu.CompilerParams(
            dimension_semantics=("parallel",),            # batch steps are independent
        ),
        cost_estimate=pl.CostEstimate(
            flops=flops, transcendentals=0, bytes_accessed=bytes_accessed),
    )(xt, w1, w2, w3p, bpack)


@jax.jit
def dqn_forward(x, params):
    """PyTorch-layout interface: x (B, STATE_SIZE) f32 -> (B, ACTION_SIZE) f32."""
    B = x.shape[0]
    tb, Bp, _ = _pick_tile(B)
    # Single pad op to feature-major (batch on lanes) with 8 sublanes; padded rows/cols
    # are ignored by the kernel / sliced off below.
    xt = jnp.pad(x.astype(jnp.float32).T,
                 ((0, SUBL - STATE_SIZE), (0, Bp - B)))
    out_t = _dqn_pallas(xt, params, tb)
    return out_t[:ACTION_SIZE, :B].T


@jax.jit
def dqn_forward_feature_major(xt, params):
    """Feature-major interface: xt (SUBL, Bp) f32 (batch on lanes, rows>=3 ignored)
    -> (SUBL, Bp) f32 (rows >= ACTION_SIZE are zero).  Use this when the surrounding
    model can stay feature-major to avoid the transpose/pad HBM round trips."""
    bp_in = xt.shape[1]
    tb, Bp, _ = _pick_tile(bp_in)
    if Bp != bp_in:
        xt = jnp.pad(xt, ((0, 0), (0, Bp - bp_in)))
    out_t = _dqn_pallas(xt, params, tb)
    return out_t[:, :bp_in]


def init_params(key):
    """PyTorch nn.Linear-style init: U(-1/sqrt(fan_in), 1/sqrt(fan_in)).
    Keeps f32 originals (for the reference) plus kernel-ready bf16 / packed arrays."""
    keys = jax.random.split(key, 6)

    def linear(kw, kb, fan_in, fan_out):
        bound = 1.0 / jnp.sqrt(jnp.float32(fan_in))
        w = jax.random.uniform(kw, (fan_out, fan_in), jnp.float32, -bound, bound)
        b = jax.random.uniform(kb, (fan_out,), jnp.float32, -bound, bound)
        return w, b

    w1, b1 = linear(keys[0], keys[1], STATE_SIZE, HIDDEN)
    w2, b2 = linear(keys[2], keys[3], HIDDEN, HIDDEN)
    w3, b3 = linear(keys[4], keys[5], HIDDEN, ACTION_SIZE)

    # Kernel-ready forms: bf16 MXU weights (cast once), W3 zero-padded to SUBL rows,
    # the three biases packed into a single (HIDDEN, 3) f32 array (one DMA).
    w2_bf16 = w2.astype(jnp.bfloat16)
    w3p_bf16 = (jnp.zeros((SUBL, HIDDEN), jnp.float32)
                .at[:ACTION_SIZE, :].set(w3)).astype(jnp.bfloat16)
    b_packed = (jnp.zeros((HIDDEN, 3), jnp.float32)
                .at[:, 0].set(b1)
                .at[:, 1].set(b2)
                .at[:ACTION_SIZE, 2].set(b3))

    return {"w1": w1, "w2": w2, "w3": w3, "b1": b1, "b2": b2, "b3": b3,
            "w2_bf16": w2_bf16, "w3p_bf16": w3p_bf16, "b_packed": b_packed}


def dqn_reference(x, params):
    """Pure-JAX f32 reference matching PyTorch semantics (x @ W.T + b)."""
    h1 = jnp.maximum(x @ params["w1"].T + params["b1"], 0.0)
    h2 = jnp.maximum(h1 @ params["w2"].T + params["b2"], 0.0)
    return h2 @ params["w3"].T + params["b3"]


if __name__ == "__main__":
    key = jax.random.PRNGKey(0)
    k_params, k_x1, k_x2 = jax.random.split(key, 3)
    params = init_params(k_params)

    # bf16 MXU inputs on layers 2/3 -> allow ~1e-2 relative error vs the f32 reference.
    ATOL = RTOL = 2e-2

    # Small PyTorch-style batch: one lane tile, single grid step.
    x_small = jax.random.normal(k_x1, (8, STATE_SIZE), jnp.float32)
    out_small = jax.block_until_ready(dqn_forward(x_small, params))
    ref_small = dqn_reference(x_small, params)
    assert out_small.shape == (8, ACTION_SIZE)
    assert jnp.allclose(out_small, ref_small, atol=ATOL, rtol=RTOL), "small-batch mismatch"

    # Ragged batch: exercises the >=2-step parallel grid + lane padding.
    x_big = jax.random.normal(k_x2, (300, STATE_SIZE), jnp.float32)
    out_big = jax.block_until_ready(dqn_forward(x_big, params))
    ref_big = dqn_reference(x_big, params)
    assert out_big.shape == (300, ACTION_SIZE)
    assert jnp.allclose(out_big, ref_big, atol=ATOL, rtol=RTOL), "multi-tile mismatch"

    # Feature-major path (no wrapper transposes): same numbers, rows >= ACTION_SIZE zero.
    xt_fm = jnp.pad(x_big.T, ((0, SUBL - STATE_SIZE), (0, 384 - 300)))
    out_fm = jax.block_until_ready(dqn_forward_feature_major(xt_fm, params))
    assert out_fm.shape == (SUBL, 384)
    assert jnp.allclose(out_fm[:ACTION_SIZE, :300].T, ref_big, atol=ATOL, rtol=RTOL), \
        "feature-major mismatch"

    print("KERNEL_OK")
</pallas_src>

<mosaic_0001>
module attributes {stable_mosaic.version = 11 : i64} {
  func.func @dqn_kernel(%arg0: i32, %arg1: memref<8x128xf32, #tpu.memory_space<vmem>>, %arg2: memref<32x3xf32, #tpu.memory_space<vmem>>, %arg3: memref<32x32xbf16, #tpu.memory_space<vmem>>, %arg4: memref<8x32xbf16, #tpu.memory_space<vmem>>, %arg5: memref<32x3xf32, #tpu.memory_space<vmem>>, %arg6: memref<8x128xf32, #tpu.memory_space<vmem>>) attributes {dimension_semantics = [#tpu.dimension_semantics<parallel>], iteration_bounds = array<i64: 1>, scalar_prefetch = 0 : i64, scratch_operands = 0 : i64, tpu.core_type = #tpu.core_type<tc>, window_params = [{transform_indices = @transform_0, window_bounds = array<i64: 8, 128>}, {pipeline_mode = #tpu.pipeline_mode<synchronous>, transform_indices = @transform_1, window_bounds = array<i64: 32, 3>}, {pipeline_mode = #tpu.pipeline_mode<synchronous>, transform_indices = @transform_2, window_bounds = array<i64: 32, 32>}, {pipeline_mode = #tpu.pipeline_mode<synchronous>, transform_indices = @transform_3, window_bounds = array<i64: 8, 32>}, {pipeline_mode = #tpu.pipeline_mode<synchronous>, transform_indices = @transform_4, window_bounds = array<i64: 32, 3>}, {transform_indices = @transform_5, window_bounds = array<i64: 8, 128>}]} {
    %c0 = arith.constant 0 : index
    %c0_0 = arith.constant 0 : index
    %0 = vector.load %arg1[%c0, %c0_0] : memref<8x128xf32, #tpu.memory_space<vmem>>, vector<8x128xf32>
    %c0_1 = arith.constant 0 : index
    %c0_2 = arith.constant 0 : index
    %1 = vector.load %arg2[%c0_1, %c0_2] : memref<32x3xf32, #tpu.memory_space<vmem>>, vector<32x3xf32>
    %c0_3 = arith.constant 0 : index
    %c0_4 = arith.constant 0 : index
    %2 = vector.load %arg5[%c0_3, %c0_4] : memref<32x3xf32, #tpu.memory_space<vmem>>, vector<32x1xf32>
    %c0_5 = arith.constant 0 : index
    %c1 = arith.constant 1 : index
    %3 = vector.load %arg5[%c0_5, %c1] : memref<32x3xf32, #tpu.memory_space<vmem>>, vector<32x1xf32>
    %c0_6 = arith.constant 0 : index
    %c2 = arith.constant 2 : index
    %4 = vector.load %arg5[%c0_6, %c2] : memref<32x3xf32, #tpu.memory_space<vmem>>, vector<8x1xf32>
    %5 = vector.extract_strided_slice %1 {offsets = [0, 0], sizes = [32, 1], strides = [1, 1]} : vector<32x3xf32> to vector<32x1xf32>
    %6 = vector.extract_strided_slice %0 {offsets = [0, 0], sizes = [1, 128], strides = [1, 1]} : vector<8x128xf32> to vector<1x128xf32>
    %7 = vector.broadcast %5 : vector<32x1xf32> to vector<32x128xf32>
    %8 = vector.broadcast %6 : vector<1x128xf32> to vector<32x128xf32>
    %9 = arith.mulf %7, %8 : vector<32x128xf32>
    %10 = vector.extract_strided_slice %1 {offsets = [0, 1], sizes = [32, 1], strides = [1, 1]} : vector<32x3xf32> to vector<32x1xf32>
    %11 = vector.extract_strided_slice %0 {offsets = [1, 0], sizes = [1, 128], strides = [1, 1]} : vector<8x128xf32> to vector<1x128xf32>
    %12 = vector.broadcast %10 : vector<32x1xf32> to vector<32x128xf32>
    %13 = vector.broadcast %11 : vector<1x128xf32> to vector<32x128xf32>
    %14 = arith.mulf %12, %13 : vector<32x128xf32>
    %15 = arith.addf %9, %14 : vector<32x128xf32>
    %16 = vector.extract_strided_slice %1 {offsets = [0, 2], sizes = [32, 1], strides = [1, 1]} : vector<32x3xf32> to vector<32x1xf32>
    %17 = vector.extract_strided_slice %0 {offsets = [2, 0], sizes = [1, 128], strides = [1, 1]} : vector<8x128xf32> to vector<1x128xf32>
    %18 = vector.broadcast %16 : vector<32x1xf32> to vector<32x128xf32>
    %19 = vector.broadcast %17 : vector<1x128xf32> to vector<32x128xf32>
    %20 = arith.mulf %18, %19 : vector<32x128xf32>
    %21 = arith.addf %15, %20 : vector<32x128xf32>
    %22 = vector.broadcast %2 : vector<32x1xf32> to vector<32x128xf32>
    %23 = arith.addf %22, %21 : vector<32x128xf32>
    %cst = arith.constant 0.000000e+00 : f32
    %24 = vector.broadcast %cst : f32 to vector<32x128xf32>
    %25 = arith.maximumf %23, %24 : vector<32x128xf32>
    %c0_7 = arith.constant 0 : index
    %c0_8 = arith.constant 0 : index
    %26 = vector.load %arg3[%c0_7, %c0_8] : memref<32x32xbf16, #tpu.memory_space<vmem>>, vector<32x32xbf16>
    %27 = arith.truncf %25 : vector<32x128xf32> to vector<32x128xbf16>
    %cst_9 = arith.constant dense<0.000000e+00> : vector<32x128xf32>
    %28 = tpu.matmul %26, %27, %cst_9 {dimension_numbers = #tpu.dot_dimension_numbers<[1], [0], [0], [1], [0, 0, 1, 1], [], []>} : vector<32x32xbf16>, vector<32x128xbf16>, vector<32x128xf32> -> vector<32x128xf32>
    %29 = vector.broadcast %3 : vector<32x1xf32> to vector<32x128xf32>
    %30 = arith.addf %28, %29 : vector<32x128xf32>
    %cst_10 = arith.constant 0.000000e+00 : f32
    %31 = vector.broadcast %cst_10 : f32 to vector<32x128xf32>
    %32 = arith.maximumf %30, %31 : vector<32x128xf32>
    %c0_11 = arith.constant 0 : index
    %c0_12 = arith.constant 0 : index
    %33 = vector.load %arg4[%c0_11, %c0_12] : memref<8x32xbf16, #tpu.memory_space<vmem>>, vector<8x32xbf16>
    %34 = arith.truncf %32 : vector<32x128xf32> to vector<32x128xbf16>
    %cst_13 = arith.constant dense<0.000000e+00> : vector<8x128xf32>
    %35 = tpu.matmul %33, %34, %cst_13 {dimension_numbers = #tpu.dot_dimension_numbers<[1], [0], [0], [1], [0, 0, 1, 1], [], []>} : vector<8x32xbf16>, vector<32x128xbf16>, vector<8x128xf32> -> vector<8x128xf32>
    %36 = vector.broadcast %4 : vector<8x1xf32> to vector<8x128xf32>
    %37 = arith.addf %35, %36 : vector<8x128xf32>
    %c0_14 = arith.constant 0 : index
    %c0_15 = arith.constant 0 : index
    %38 = vector.load %arg6[%c0_14, %c0_15] : memref<8x128xf32, #tpu.memory_space<vmem>>, vector<8x128xf32>
    tpu.vector_store %arg6[%c0_14, %c0_15], %37 {strides = array<i32>} : memref<8x128xf32, #tpu.memory_space<vmem>>, vector<8x128xf32>,
    return
  }
  func.func @transform_0(%arg0: i32) -> (i32, i32) {
    %c0_i32 = arith.constant 0 : i32
    %c0_i32_0 = arith.constant 0 : i32
    return %c0_i32, %arg0 : i32, i32
  }
  func.func @transform_1(%arg0: i32) -> (i32, i32) {
    %c0_i32 = arith.constant 0 : i32
    %c0_i32_0 = arith.constant 0 : i32
    %c0_i32_1 = arith.constant 0 : i32
    return %c0_i32, %c0_i32_0 : i32, i32
  }
  func.func @transform_2(%arg0: i32) -> (i32, i32) {
    %c0_i32 = arith.constant 0 : i32
    %c0_i32_0 = arith.constant 0 : i32
    %c0_i32_1 = arith.constant 0 : i32
    return %c0_i32, %c0_i32_0 : i32, i32
  }
  func.func @transform_3(%arg0: i32) -> (i32, i32) {
    %c0_i32 = arith.constant 0 : i32
    %c0_i32_0 = arith.constant 0 : i32
    %c0_i32_1 = arith.constant 0 : i32
    return %c0_i32, %c0_i32_0 : i32, i32
  }
  func.func @transform_4(%arg0: i32) -> (i32, i32) {
    %c0_i32 = arith.constant 0 : i32
    %c0_i32_0 = arith.constant 0 : i32
    %c0_i32_1 = arith.constant 0 : i32
    return %c0_i32, %c0_i32_0 : i32, i32
  }
  func.func @transform_5(%arg0: i32) -> (i32, i32) {
    %c0_i32 = arith.constant 0 : i32
    %c0_i32_0 = arith.constant 0 : i32
    return %c0_i32, %arg0 : i32, i32
  }
}

</mosaic_0001>

<llo_original>
// kernel: dqn_forward.1
$region0: #{dqn_forward.1}
  #allocation0 [shape = 'u32[]', space=smem, size = 0x4, offset = 0x4, fixed_abs, tag = 'smem constant byte address 0x4 - core index']
  #allocation1 [shape = 'u32[144,128]{1,0:T(1,128)}', space=vmem, size = 0x12000, scoped, tag = 'internal scratch']
  %s0 = inlined_call_operand.vmem [shape: f32[8,128], index: 0, kind: input, shape index: {}]
  %s1 = inlined_call_operand.vmem [shape: f32[32,3], index: 1, kind: input, shape index: {}]
  %s2 = inlined_call_operand.vmem [shape: bf16[32,32], index: 2, kind: input, shape index: {}]
  %s3 = inlined_call_operand.vmem [shape: bf16[8,32], index: 3, kind: input, shape index: {}]
  %s4 = inlined_call_operand.vmem [shape: f32[32,3], index: 4, kind: input, shape index: {}]
  %s5 = inlined_call_operand.vmem [shape: f32[8,128], index: 5, kind: output, shape index: {}]
  %s6 = sld [smem:[#allocation0]]
  $region30: #{dqn_forward.1} parent=0
    _
  %s8 = ssub.s32 1, %s6
  %s9 = scalar_select 0, %s8, %s6
  // Predicated region
  $region2: #{dqn_forward.1} parent=0 // pred_check
    _
  $region3: #{dqn_forward.1} parent=0 // pred_check_branch
    %11 = sbr.rel (0) target = $region5
  $region4: #{dqn_forward.1} parent=0 // pred_region
    _
  $region5: #{dqn_forward.1} parent=0 // pred_fallthru
    _
  // Predicated region
  $region6: #{dqn_forward.1} parent=0 // pred_check
    _
  $region7: #{dqn_forward.1} parent=0 // pred_check_branch
    %13 = sbr.rel (0) target = $region9
  $region8: #{dqn_forward.1} parent=0 // pred_region
    _
  $region9: #{dqn_forward.1} parent=0 // pred_fallthru
    _
  // Predicated region
  $region10: #{dqn_forward.1} parent=0 // pred_check
    _
  $region11: #{dqn_forward.1} parent=0 // pred_check_branch
    %15 = sbr.rel (0) target = $region13
  $region12: #{dqn_forward.1} parent=0 // pred_region
    _
  $region13: #{dqn_forward.1} parent=0 // pred_fallthru
    _
  // Predicated region
  $region14: #{dqn_forward.1} parent=0 // pred_check
    _
  $region15: #{dqn_forward.1} parent=0 // pred_check_branch
    %17 = sbr.rel (0) target = $region17
  $region16: #{dqn_forward.1} parent=0 // pred_region
    _
  $region17: #{dqn_forward.1} parent=0 // pred_fallthru
    _
  // Predicated region
  $region18: #{dqn_forward.1} parent=0 // pred_check
    _
  $region19: #{dqn_forward.1} parent=0 // pred_check_branch
    %19 = sbr.rel (0) target = $region21
  $region20: #{dqn_forward.1} parent=0 // pred_region
    _
  $region21: #{dqn_forward.1} parent=0 // pred_fallthru
    _
  %v21 = vld [vmem:[%s0] sm:$0xff]
  %v22 = vld [vmem:[%s1] sm:$0xff]
  %v23 = vld [vmem:[%s1 + $0x8] sm:$0xff]
  %v24 = vld [vmem:[%s1 + $0x10] sm:$0xff]
  %v25 = vld [vmem:[%s1 + $0x18] sm:$0xff]
  %v26 = vld [vmem:[%s4] sm:$0xff]
  %v27 = vld [vmem:[%s4 + $0x8] sm:$0xff]
  %v28 = vld [vmem:[%s4 + $0x10] sm:$0xff]
  %v29 = vld [vmem:[%s4 + $0x18] sm:$0xff]
  %31 = vset.pattern.permute.xlu0 0
  %32 = vperm.xlu0 %31, %v22
  %v33 = vpop.permute.xlu0 %32
  %36 = vset.pattern.permute.xlu0 0
  %37 = vperm.xlu0 %36, %v23
  %v38 = vpop.permute.xlu0 %37
  %41 = vset.pattern.permute.xlu0 0
  %42 = vperm.xlu0 %41, %v24
  %v43 = vpop.permute.xlu0 %42
  %46 = vset.pattern.permute.xlu0 0
  %47 = vperm.xlu0 %46, %v25
  %v48 = vpop.permute.xlu0 %47
  %v50 = vlaneseq
  %v51 = vshrl.u32 %v50, 7
  %v52 = vsub.s32 0, %v51
  %v53 = vrot.slane %v21, %v52
  %v54 = vmul.f32 %v33, %v53
  %v55 = vmul.f32 %v38, %v53
  %v56 = vmul.f32 %v43, %v53
  %v57 = vmul.f32 %v48, %v53
  %58 = vset.pattern.permute.xlu0 1
  %59 = vperm.xlu0 %58, %v22
  %v60 = vpop.permute.xlu0 %59
  %62 = vset.pattern.permute.xlu0 1
  %63 = vperm.xlu0 %62, %v23
  %v64 = vpop.permute.xlu0 %63
  %66 = vset.pattern.permute.xlu0 1
  %67 = vperm.xlu0 %66, %v24
  %v68 = vpop.permute.xlu0 %67
  %70 = vset.pattern.permute.xlu0 1
  %71 = vperm.xlu0 %70, %v25
  %v72 = vpop.permute.xlu0 %71
  %v74 = vlaneseq
  %v75 = vshrl.u32 %v74, 7
  %v76 = vsub.s32 1, %v75
  %v77 = vrot.slane %v21, %v76
  %v78 = vmul.f32 %v60, %v77
  %v79 = vmul.f32 %v64, %v77
  %v80 = vmul.f32 %v68, %v77
  %v81 = vmul.f32 %v72, %v77
  %v82 = vadd.f32 %v54, %v78
  %v83 = vadd.f32 %v55, %v79
  %v84 = vadd.f32 %v56, %v80
  %v85 = vadd.f32 %v57, %v81
  %86 = vset.pattern.permute.xlu0 2
  %87 = vperm.xlu0 %86, %v22
  %v88 = vpop.permute.xlu0 %87
  %90 = vset.pattern.permute.xlu0 2
  %91 = vperm.xlu0 %90, %v23
  %v92 = vpop.permute.xlu0 %91
  %94 = vset.pattern.permute.xlu0 2
  %95 = vperm.xlu0 %94, %v24
  %v96 = vpop.permute.xlu0 %95
  %98 = vset.pattern.permute.xlu0 2
  %99 = vperm.xlu0 %98, %v25
  %v100 = vpop.permute.xlu0 %99
  %v102 = vlaneseq
  %v103 = vshrl.u32 %v102, 7
  %v104 = vsub.s32 2, %v103
  %v105 = vrot.slane %v21, %v104
  %v106 = vmul.f32 %v88, %v105
  %v107 = vmul.f32 %v92, %v105
  %v108 = vmul.f32 %v96, %v105
  %v109 = vmul.f32 %v100, %v105
  %v110 = vadd.f32 %v82, %v106
  %v111 = vadd.f32 %v83, %v107
  %v112 = vadd.f32 %v84, %v108
  %v113 = vadd.f32 %v85, %v109
  %115 = vset.pattern.permute.xlu0 0
  %116 = vperm.xlu0 %115, %v26
  %v117 = vpop.permute.xlu0 %116
  %120 = vset.pattern.permute.xlu0 0
  %121 = vperm.xlu0 %120, %v27
  %v122 = vpop.permute.xlu0 %121
  %125 = vset.pattern.permute.xlu0 0
  %126 = vperm.xlu0 %125, %v28
  %v127 = vpop.permute.xlu0 %126
  %130 = vset.pattern.permute.xlu0 0
  %131 = vperm.xlu0 %130, %v29
  %v132 = vpop.permute.xlu0 %131
  %v134 = vadd.f32 %v117, %v110
  %v135 = vadd.f32 %v122, %v111
  %v136 = vadd.f32 %v127, %v112
  %v137 = vadd.f32 %v132, %v113
  %v138 = vmax.f32 %v134, 0.0
  %v139 = vmax.f32 %v135, 0.0
  %v140 = vmax.f32 %v136, 0.0
  %v141 = vmax.f32 %v137, 0.0
  %v142 = vld [vmem:[%s2] sm:$0xf]
  %v143 = vld [vmem:[%s2 + $0x4] sm:$0xf]
  %v144 = vld [vmem:[%s2 + $0x8] sm:$0xf]
  %v145 = vld [vmem:[%s2 + $0xc] sm:$0xf]
  %v146 = vpack.c.bf16 %v139, %v138
  %v147 = vpack.c.bf16 %v141, %v140
  %148 = vset.pattern.permute.xlu0 1
  %149 = vperm.xlu0 %148, %v26
  %v150 = vpop.permute.xlu0 %149
  %152 = vset.pattern.permute.xlu0 1
  %153 = vperm.xlu0 %152, %v27
  %v154 = vpop.permute.xlu0 %153
  %156 = vset.pattern.permute.xlu0 1
  %157 = vperm.xlu0 %156, %v28
  %v158 = vpop.permute.xlu0 %157
  %160 = vset.pattern.permute.xlu0 1
  %161 = vperm.xlu0 %160, %v29
  %v162 = vpop.permute.xlu0 %161
  %v168 = vunpack.c.l.b16 %v142
  %v169 = vunpack.c.l.b16 %v143
  %v170 = vunpack.c.l.b16 %v144
  %v171 = vunpack.c.l.b16 %v145
  %v172 = vpack.c.b16 %v169, %v168
  %v173 = vpack.c.b16 %v171, %v170
  %vm174 = vcmask 261120
  %v176 = vsel %vm174, %v172, 0
  %v179 = vsel %vm174, %v173, 0
  %181 = vmatprep.subr.bf16.mxu0 0
  %182 = vmatpush1.bf16.msra.mxu0 0
  %183 = vmatprep.subr.bf16.mxu0 0
  %184 = vmatpush1.bf16.msra.mxu0 0
  %185 = vmatprep.subr.bf16.mxu0 0
  %186 = vmatpush1.bf16.msra.mxu0 0
  %187 = vmatprep.subr.bf16.mxu0 0
  %188 = vmatpush1.bf16.msra.mxu0 0
  %189 = vmatprep.subr.bf16.mxu0 0
  %190 = vmatpush1.bf16.msra.mxu0 0
  %191 = vmatprep.subr.bf16.mxu0 0
  %192 = vmatpush1.bf16.msra.mxu0 0
  %193 = vmatprep.subr.bf16.mxu0 0
  %194 = vmatpush1.bf16.msra.mxu0 %v147
  %195 = vmatprep.subr.bf16.mxu0 0
  %196 = vmatpush1.bf16.msra.mxu0 %v146
  %197 = vmatprep.subr.bf16.mxu0 0
  %198 = vmatpush2.bf16.msra.mxu0 0
  %199 = vmatprep.subr.bf16.mxu0 0
  %200 = vmatpush2.bf16.msra.mxu0 0
  %201 = vmatprep.subr.bf16.mxu0 0
  %202 = vmatpush2.bf16.msra.mxu0 0
  %203 = vmatprep.subr.bf16.mxu0 0
  %204 = vmatpush2.bf16.msra.mxu0 0
  %205 = vmatprep.subr.bf16.mxu0 0
  %206 = vmatpush2.bf16.msra.mxu0 0
  %207 = vmatprep.subr.bf16.mxu0 0
  %208 = vmatpush2.bf16.msra.mxu0 0
  %209 = vmatprep.subr.bf16.mxu0 0
  %210 = vmatpush2.bf16.msra.mxu0 0
  %211 = vmatprep.subr.bf16.mxu0 0
  %212 = vmatpush2.bf16.msra.mxu0 0
  %213 = vmatprep.mubr.bf16.mxu0 0
  %214 = vmatmul.mubr.bf16.gmra.mxu0 %v176
  %v215 = vpop.f32.mrf.mxu0
  %v216 = vadd.f32 %v150, %v215
  %v217 = vpop.f32.mrf.mxu0
  %v218 = vpop.f32.mrf.mxu0
  %v219 = vadd.f32 %v154, %v218
  %v220 = vpop.f32.mrf.mxu0
  %221 = vmatprep.mubr.bf16.mxu0 0
  %222 = vmatmul.mubr.bf16.gmra.mxu0 %v179
  %v223 = vpop.f32.mrf.mxu0
  %v224 = vadd.f32 %v158, %v223
  %v225 = vpop.f32.mrf.mxu0
  %v226 = vpop.f32.mrf.mxu0
  %v227 = vadd.f32 %v162, %v226
  %v228 = vpop.f32.mrf.mxu0
  %229 = vdwg.mxu0
  %v230 = vmax.f32 %v216, 0.0
  %v231 = vmax.f32 %v219, 0.0
  %v232 = vmax.f32 %v224, 0.0
  %v233 = vmax.f32 %v227, 0.0
  %v234 = vld [vmem:[%s3] sm:$0xf]
  %v235 = vpack.c.bf16 %v231, %v230
  %v236 = vpack.c.bf16 %v233, %v232
  %237 = vset.pattern.permute.xlu0 2
  %238 = vperm.xlu0 %237, %v26
  %v239 = vpop.permute.xlu0 %238
  %v242 = vsel %vm174, %v234, 0
  %244 = vmatprep.subr.bf16.mxu0 0
  %245 = vmatpush1.bf16.msra.mxu0 0
  %246 = vmatprep.subr.bf16.mxu0 0
  %247 = vmatpush1.bf16.msra.mxu0 0
  %248 = vmatprep.subr.bf16.mxu0 0
  %249 = vmatpush1.bf16.msra.mxu0 0
  %250 = vmatprep.subr.bf16.mxu0 0
  %251 = vmatpush1.bf16.msra.mxu0 0
  %252 = vmatprep.subr.bf16.mxu0 0
  %253 = vmatpush1.bf16.msra.mxu0 0
  %254 = vmatprep.subr.bf16.mxu0 0
  %255 = vmatpush1.bf16.msra.mxu0 0
  %256 = vmatprep.subr.bf16.mxu0 0
  %257 = vmatpush1.bf16.msra.mxu0 %v236
  %258 = vmatprep.subr.bf16.mxu0 0
  %259 = vmatpush1.bf16.msra.mxu0 %v235
  %260 = vmatprep.subr.bf16.mxu0 0
  %261 = vmatpush2.bf16.msra.mxu0 0
  %262 = vmatprep.subr.bf16.mxu0 0
  %263 = vmatpush2.bf16.msra.mxu0 0
  %264 = vmatprep.subr.bf16.mxu0 0
  %265 = vmatpush2.bf16.msra.mxu0 0
  %266 = vmatprep.subr.bf16.mxu0 0
  %267 = vmatpush2.bf16.msra.mxu0 0
  %268 = vmatprep.subr.bf16.mxu0 0
  %269 = vmatpush2.bf16.msra.mxu0 0
  %270 = vmatprep.subr.bf16.mxu0 0
  %271 = vmatpush2.bf16.msra.mxu0 0
  %272 = vmatprep.subr.bf16.mxu0 0
  %273 = vmatpush2.bf16.msra.mxu0 0
  %274 = vmatprep.subr.bf16.mxu0 0
  %275 = vmatpush2.bf16.msra.mxu0 0
  %276 = vmatprep.mubr.bf16.mxu0 0
  %277 = vmatmul.mubr.bf16.gmra.mxu0 %v242
  %v278 = vpop.f32.mrf.mxu0
  %v279 = vadd.f32 %v239, %v278
  %v280 = vpop.f32.mrf.mxu0
  %v281 = vpop.f32.mrf.mxu0
  %v282 = vpop.f32.mrf.mxu0
  %283 = vdwg.mxu0
  %284 = vst [vmem:[%s5] sm:$0xff] %v279
  // Predicated region
  $region22: #{dqn_forward.1} parent=0 // pred_check
    _
  $region23: #{dqn_forward.1} parent=0 // pred_check_branch
    %286 = sbr.rel (0) target = $region25
  $region24: #{dqn_forward.1} parent=0 // pred_region
    _
  $region25: #{dqn_forward.1} parent=0 // pred_fallthru
    _
  // Predicated region
  $region26: #{dqn_forward.1} parent=0 // pred_check
    _
  $region27: #{dqn_forward.1} parent=0 // pred_check_branch
    %288 = sbr.rel (0) target = $region29
  $region28: #{dqn_forward.1} parent=0 // pred_region
    _
  $region29: #{dqn_forward.1} parent=0 // pred_fallthru
    _

</llo_original>
